<compile_context>
chip_gen: v7x
topology: tpu7x:2x2x1
jax: 0.10.0
libtpu: 0.0.40
codegen_flags: <defaults>
</compile_context>

<pallas_src>
import functools

import jax
import jax.numpy as jnp
from jax import lax
from jax.experimental import pallas as pl
from jax.experimental.pallas import tpu as pltpu

BETA = 0.2


def _vq_kernel(x_ref, wpre_ref, bpre_ref, emb_ref, epost_ref, out_ref, sse_ref,
               *, cin, chid, n_codes, cout, st, hw_valid, mask_tail):
    """One grid step processes a (st, 128) token tile of one batch image.

    x_ref    : (Cin, st, 128)  VMEM   input activations (tokens on sublane/lane)
    wpre_ref : (Chid, Cin)     SMEM   pre-conv weight (transposed)
    bpre_ref : (Chid,)         SMEM   pre-conv bias
    emb_ref  : (K, Chid)       SMEM   raw codebook (for residual-form distance)
    epost_ref: (K, Cout)       SMEM   folded codebook: emb @ W_post + b_post
    out_ref  : (Cout, st, 128) VMEM   output activations
    sse_ref  : (1, 1)          VMEM   per-tile SSE partial (single element)
    """
    plane = x_ref.shape[1:]  # (st, 128)

    # ---- pre_quant 1x1 conv: q[c] = sum_j Wpre[c, j] * x[j] + b[c]  (VPU) ----
    x = [x_ref[j] for j in range(cin)]
    q = []
    for c in range(chid):
        acc = wpre_ref[c, 0] * x[0]           # seed from first product (no full() broadcast)
        for j in range(1, cin):
            acc = acc + wpre_ref[c, j] * x[j]
        q.append(acc + bpre_ref[c])           # bias fused at the end

    # ---- residual-form squared distance to code k (exact; argmin-safe) ----
    def dist(k):
        r = q[0] - emb_ref[k, 0]
        d = r * r
        for c in range(1, chid):
            r = q[c] - emb_ref[k, c]
            d = d + r * r
        return d

    # ---- running argmin over codes; carry the folded (emb@Wpost+b) rows ----
    min_d = dist(0)
    out_rows = [jnp.full(plane, epost_ref[0, o], dtype=jnp.float32)
                for o in range(cout)]
    for k in range(1, n_codes):
        d = dist(k)
        better = d < min_d  # strict '<' => first-index tie-break (matches torch.argmin)
        min_d = jnp.where(better, d, min_d)
        for o in range(cout):
            out_rows[o] = jnp.where(better, epost_ref[k, o], out_rows[o])

    for o in range(cout):
        out_ref[o] = out_rows[o]

    # ---- loss partial: min_d == ||quant - q||^2 at the argmin (exact, >= 0) ----
    if mask_tail:  # only compiled when the token count was padded
        row_ids = lax.broadcasted_iota(jnp.int32, plane, 0)
        lane_ids = lax.broadcasted_iota(jnp.int32, plane, 1)
        tok = pl.program_id(1) * (st * 128) + row_ids * 128 + lane_ids
        min_d = jnp.where(tok < hw_valid, min_d, 0.0)

    sse_ref[...] = jnp.full((1, 1), jnp.sum(min_d), dtype=jnp.float32)


def _choose_tile(rows, batch, target=512, min_st=128):
    """Pick (sublane rows per tile, padded total rows).

    HBM-bound kernel -> large tiles (~512 rows == 64K tokens, ~7 MiB VMEM incl.
    double-buffered I/O and live temporaries: fits every generation's default
    scoped VMEM).  Tiles shrink (>=min_st) to keep >= ~8 grid steps for the
    v7x dual-TensorCore split; awkward row counts are padded to a tile multiple
    instead of using an unbounded full-extent block.
    """
    if rows <= target:
        return rows, rows                      # single (full-extent) tile per image
    st = target                                # multiple of 8
    while st > min_st and batch * (-(-rows // st)) < 8:
        st //= 2
    rows_padded = (-(-rows // st)) * st
    return st, rows_padded


def vq_latent_space(x_nchw, params):
    w_pre = jnp.asarray(params["w_pre"], jnp.float32)    # (Cin, Chid)
    b_pre = jnp.asarray(params["b_pre"], jnp.float32)    # (Chid,)
    emb = jnp.asarray(params["emb"], jnp.float32)        # (K, Chid)
    w_post = jnp.asarray(params["w_post"], jnp.float32)  # (Chid, Cout)
    b_post = jnp.asarray(params["b_post"], jnp.float32)  # (Cout,)

    B, Cin, H, W = x_nchw.shape
    Chid = w_pre.shape[1]
    Cout = w_post.shape[1]
    K = emb.shape[0]
    HW = H * W

    rows = -(-HW // 128)                       # lane-width token rows (ceil)
    st, rows_padded = _choose_tile(rows, B)
    n_tiles = rows_padded // st
    hw_padded = rows_padded * 128
    mask_tail = hw_padded != HW

    # Tokens-on-(sublane, lane) view; pad the tail (zeros) only when needed.
    x_flat = jnp.asarray(x_nchw, jnp.float32).reshape(B, Cin, HW)
    if mask_tail:
        x_flat = jnp.pad(x_flat, ((0, 0), (0, 0), (0, hw_padded - HW)))
    x4 = x_flat.reshape(B, Cin, rows_padded, 128)

    # Hoisted constants: transposed pre-conv weight + post-conv folded into codebook.
    w_pre_t = w_pre.T                                     # (Chid, Cin)
    emb_post = emb @ w_post + b_post[None, :]             # (K, Cout)

    kernel = functools.partial(_vq_kernel, cin=Cin, chid=Chid, n_codes=K,
                               cout=Cout, st=st, hw_valid=HW, mask_tail=mask_tail)
    smem_specs = [pl.BlockSpec(memory_space=pltpu.MemorySpace.SMEM) for _ in range(4)]

    out4, partials = pl.pallas_call(
        kernel,
        out_shape=(
            jax.ShapeDtypeStruct((B, Cout, rows_padded, 128), jnp.float32),
            jax.ShapeDtypeStruct((B, n_tiles, 1, 1), jnp.float32),
        ),
        grid_spec=pltpu.PrefetchScalarGridSpec(
            num_scalar_prefetch=0,
            grid=(B, n_tiles),
            in_specs=[
                pl.BlockSpec((None, Cin, st, 128), lambda b, t: (b, 0, t, 0)),
                *smem_specs,
            ],
            out_specs=[
                pl.BlockSpec((None, Cout, st, 128), lambda b, t: (b, 0, t, 0)),
                pl.BlockSpec((None, None, 1, 1), lambda b, t: (b, t, 0, 0)),
            ],
        ),
        compiler_params=pltpu.CompilerParams(
            dimension_semantics=("parallel", "parallel")),
    )(x4, w_pre_t, b_pre, emb, emb_post)

    out = out4.reshape(B, Cout, hw_padded)[:, :, :HW].reshape(B, Cout, H, W)

    # finalize the loss from per-tile SSE partials (keeps the grid fully parallel)
    sse = jnp.sum(partials)
    mse = sse / (B * HW * Chid)
    quantize_loss = (1.0 + BETA) * mse  # codebook_loss + beta*commitment_loss (equal fwd values)
    return out, quantize_loss


def init_params(key, in_size, out_size, hidden_size=2, n_embeddings=3, embedding_dim=2):
    assert hidden_size == embedding_dim, "cdist requires hidden_size == embedding_dim"
    k1, k2, k3, k4, k5 = jax.random.split(key, 5)
    return dict(
        w_pre=jax.random.normal(k1, (in_size, hidden_size), jnp.float32) * 0.5,
        b_pre=jax.random.normal(k2, (hidden_size,), jnp.float32) * 0.1,
        emb=jax.random.normal(k3, (n_embeddings, embedding_dim), jnp.float32),
        w_post=jax.random.normal(k4, (hidden_size, out_size), jnp.float32) * 0.5,
        b_post=jax.random.normal(k5, (out_size,), jnp.float32) * 0.1,
    )


def reference(x_nchw, params):
    """Pure-JAX reference matching the PyTorch forward pass."""
    B, Cin, H, W = x_nchw.shape
    x_flat = jnp.transpose(x_nchw, (0, 2, 3, 1)).reshape(B * H * W, Cin)
    q = x_flat @ params["w_pre"] + params["b_pre"][None, :]
    emb = params["emb"]
    d2 = (jnp.sum(q * q, axis=1, keepdims=True)
          - 2.0 * q @ emb.T
          + jnp.sum(emb * emb, axis=1)[None, :])
    idx = jnp.argmin(d2, axis=1)
    quant = emb[idx]
    mse = jnp.mean((quant - q) ** 2)
    loss = mse + BETA * mse
    out_flat = quant @ params["w_post"] + params["b_post"][None, :]
    Cout = params["w_post"].shape[1]
    out = out_flat.reshape(B, H, W, Cout).transpose(0, 3, 1, 2)
    return out, loss


if __name__ == "__main__":
    key = jax.random.PRNGKey(0)
    kx, kp = jax.random.split(key)

    B, Cin, H, W = 2, 4, 16, 16
    out_size = 4
    x = jax.random.normal(kx, (B, Cin, H, W), jnp.float32)
    params = init_params(kp, in_size=Cin, out_size=out_size,
                         hidden_size=2, n_embeddings=3, embedding_dim=2)

    out, loss = jax.jit(vq_latent_space)(x, params)
    out = jax.block_until_ready(out)
    loss = jax.block_until_ready(loss)

    ref_out, ref_loss = reference(x, params)
    assert out.shape == (B, out_size, H, W)
    assert jnp.allclose(out, ref_out, atol=1e-4, rtol=1e-4), \
        float(jnp.max(jnp.abs(out - ref_out)))
    assert jnp.allclose(loss, ref_loss, atol=1e-4, rtol=1e-4), \
        (float(loss), float(ref_loss))

    print("KERNEL_OK")
</pallas_src>

<mosaic_0001>
module attributes {stable_mosaic.version = 11 : i64} {
  func.func @_vq_kernel(%arg0: i32, %arg1: i32, %arg2: memref<1x4x2x128xf32, #tpu.memory_space<vmem>>, %arg3: memref<2x4xf32, #tpu.memory_space<smem>>, %arg4: memref<2xf32, #tpu.memory_space<smem>>, %arg5: memref<3x2xf32, #tpu.memory_space<smem>>, %arg6: memref<3x4xf32, #tpu.memory_space<smem>>, %arg7: memref<1x4x2x128xf32, #tpu.memory_space<vmem>>, %arg8: memref<1x1x1x1xf32, #tpu.memory_space<vmem>>) attributes {dimension_semantics = [#tpu.dimension_semantics<parallel>, #tpu.dimension_semantics<parallel>], iteration_bounds = array<i64: 2, 1>, scalar_prefetch = 0 : i64, scratch_operands = 0 : i64, tpu.core_type = #tpu.core_type<tc>, window_params = [{transform_indices = @transform_0, window_bounds = array<i64: 1, 4, 2, 128>}, {transform_indices = @transform_1, window_bounds = array<i64: 2, 4>}, {transform_indices = @transform_2, window_bounds = array<i64: 2>}, {transform_indices = @transform_3, window_bounds = array<i64: 3, 2>}, {transform_indices = @transform_4, window_bounds = array<i64: 3, 4>}, {transform_indices = @transform_5, window_bounds = array<i64: 1, 4, 2, 128>}, {transform_indices = @transform_6, window_bounds = array<i64: 1, 1, 1, 1>}]} {
    %c0 = arith.constant 0 : index
    %c0_0 = arith.constant 0 : index
    %c0_1 = arith.constant 0 : index
    %c0_2 = arith.constant 0 : index
    %0 = vector.load %arg2[%c0, %c0_0, %c0_1, %c0_2] : memref<1x4x2x128xf32, #tpu.memory_space<vmem>>, vector<1x1x2x128xf32>
    %1 = vector.shape_cast %0 : vector<1x1x2x128xf32> to vector<2x128xf32>
    %c0_3 = arith.constant 0 : index
    %c1 = arith.constant 1 : index
    %c0_4 = arith.constant 0 : index
    %c0_5 = arith.constant 0 : index
    %2 = vector.load %arg2[%c0_3, %c1, %c0_4, %c0_5] : memref<1x4x2x128xf32, #tpu.memory_space<vmem>>, vector<1x1x2x128xf32>
    %3 = vector.shape_cast %2 : vector<1x1x2x128xf32> to vector<2x128xf32>
    %c0_6 = arith.constant 0 : index
    %c2 = arith.constant 2 : index
    %c0_7 = arith.constant 0 : index
    %c0_8 = arith.constant 0 : index
    %4 = vector.load %arg2[%c0_6, %c2, %c0_7, %c0_8] : memref<1x4x2x128xf32, #tpu.memory_space<vmem>>, vector<1x1x2x128xf32>
    %5 = vector.shape_cast %4 : vector<1x1x2x128xf32> to vector<2x128xf32>
    %c0_9 = arith.constant 0 : index
    %c3 = arith.constant 3 : index
    %c0_10 = arith.constant 0 : index
    %c0_11 = arith.constant 0 : index
    %6 = vector.load %arg2[%c0_9, %c3, %c0_10, %c0_11] : memref<1x4x2x128xf32, #tpu.memory_space<vmem>>, vector<1x1x2x128xf32>
    %7 = vector.shape_cast %6 : vector<1x1x2x128xf32> to vector<2x128xf32>
    %c0_12 = arith.constant 0 : index
    %c0_13 = arith.constant 0 : index
    %8 = memref.load %arg3[%c0_12, %c0_13] : memref<2x4xf32, #tpu.memory_space<smem>>
    %9 = vector.broadcast %8 : f32 to vector<2x128xf32>
    %10 = arith.mulf %9, %1 : vector<2x128xf32>
    %c0_14 = arith.constant 0 : index
    %c1_15 = arith.constant 1 : index
    %11 = memref.load %arg3[%c0_14, %c1_15] : memref<2x4xf32, #tpu.memory_space<smem>>
    %12 = vector.broadcast %11 : f32 to vector<2x128xf32>
    %13 = arith.mulf %12, %3 : vector<2x128xf32>
    %14 = arith.addf %10, %13 : vector<2x128xf32>
    %c0_16 = arith.constant 0 : index
    %c2_17 = arith.constant 2 : index
    %15 = memref.load %arg3[%c0_16, %c2_17] : memref<2x4xf32, #tpu.memory_space<smem>>
    %16 = vector.broadcast %15 : f32 to vector<2x128xf32>
    %17 = arith.mulf %16, %5 : vector<2x128xf32>
    %18 = arith.addf %14, %17 : vector<2x128xf32>
    %c0_18 = arith.constant 0 : index
    %c3_19 = arith.constant 3 : index
    %19 = memref.load %arg3[%c0_18, %c3_19] : memref<2x4xf32, #tpu.memory_space<smem>>
    %20 = vector.broadcast %19 : f32 to vector<2x128xf32>
    %21 = arith.mulf %20, %7 : vector<2x128xf32>
    %22 = arith.addf %18, %21 : vector<2x128xf32>
    %c0_20 = arith.constant 0 : index
    %23 = memref.load %arg4[%c0_20] : memref<2xf32, #tpu.memory_space<smem>>
    %24 = vector.broadcast %23 : f32 to vector<2x128xf32>
    %25 = arith.addf %22, %24 : vector<2x128xf32>
    %c1_21 = arith.constant 1 : index
    %c0_22 = arith.constant 0 : index
    %26 = memref.load %arg3[%c1_21, %c0_22] : memref<2x4xf32, #tpu.memory_space<smem>>
    %27 = vector.broadcast %26 : f32 to vector<2x128xf32>
    %28 = arith.mulf %27, %1 : vector<2x128xf32>
    %c1_23 = arith.constant 1 : index
    %c1_24 = arith.constant 1 : index
    %29 = memref.load %arg3[%c1_23, %c1_24] : memref<2x4xf32, #tpu.memory_space<smem>>
    %30 = vector.broadcast %29 : f32 to vector<2x128xf32>
    %31 = arith.mulf %30, %3 : vector<2x128xf32>
    %32 = arith.addf %28, %31 : vector<2x128xf32>
    %c1_25 = arith.constant 1 : index
    %c2_26 = arith.constant 2 : index
    %33 = memref.load %arg3[%c1_25, %c2_26] : memref<2x4xf32, #tpu.memory_space<smem>>
    %34 = vector.broadcast %33 : f32 to vector<2x128xf32>
    %35 = arith.mulf %34, %5 : vector<2x128xf32>
    %36 = arith.addf %32, %35 : vector<2x128xf32>
    %c1_27 = arith.constant 1 : index
    %c3_28 = arith.constant 3 : index
    %37 = memref.load %arg3[%c1_27, %c3_28] : memref<2x4xf32, #tpu.memory_space<smem>>
    %38 = vector.broadcast %37 : f32 to vector<2x128xf32>
    %39 = arith.mulf %38, %7 : vector<2x128xf32>
    %40 = arith.addf %36, %39 : vector<2x128xf32>
    %c1_29 = arith.constant 1 : index
    %41 = memref.load %arg4[%c1_29] : memref<2xf32, #tpu.memory_space<smem>>
    %42 = vector.broadcast %41 : f32 to vector<2x128xf32>
    %43 = arith.addf %40, %42 : vector<2x128xf32>
    %c0_30 = arith.constant 0 : index
    %c0_31 = arith.constant 0 : index
    %44 = memref.load %arg5[%c0_30, %c0_31] : memref<3x2xf32, #tpu.memory_space<smem>>
    %45 = vector.broadcast %44 : f32 to vector<2x128xf32>
    %46 = arith.subf %25, %45 : vector<2x128xf32>
    %47 = arith.mulf %46, %46 : vector<2x128xf32>
    %c0_32 = arith.constant 0 : index
    %c1_33 = arith.constant 1 : index
    %48 = memref.load %arg5[%c0_32, %c1_33] : memref<3x2xf32, #tpu.memory_space<smem>>
    %49 = vector.broadcast %48 : f32 to vector<2x128xf32>
    %50 = arith.subf %43, %49 : vector<2x128xf32>
    %51 = arith.mulf %50, %50 : vector<2x128xf32>
    %52 = arith.addf %47, %51 : vector<2x128xf32>
    %c0_34 = arith.constant 0 : index
    %c0_35 = arith.constant 0 : index
    %53 = memref.load %arg6[%c0_34, %c0_35] : memref<3x4xf32, #tpu.memory_space<smem>>
    %54 = vector.broadcast %53 : f32 to vector<2x128xf32>
    %c0_36 = arith.constant 0 : index
    %c1_37 = arith.constant 1 : index
    %55 = memref.load %arg6[%c0_36, %c1_37] : memref<3x4xf32, #tpu.memory_space<smem>>
    %56 = vector.broadcast %55 : f32 to vector<2x128xf32>
    %c0_38 = arith.constant 0 : index
    %c2_39 = arith.constant 2 : index
    %57 = memref.load %arg6[%c0_38, %c2_39] : memref<3x4xf32, #tpu.memory_space<smem>>
    %58 = vector.broadcast %57 : f32 to vector<2x128xf32>
    %c0_40 = arith.constant 0 : index
    %c3_41 = arith.constant 3 : index
    %59 = memref.load %arg6[%c0_40, %c3_41] : memref<3x4xf32, #tpu.memory_space<smem>>
    %60 = vector.broadcast %59 : f32 to vector<2x128xf32>
    %c1_42 = arith.constant 1 : index
    %c0_43 = arith.constant 0 : index
    %61 = memref.load %arg5[%c1_42, %c0_43] : memref<3x2xf32, #tpu.memory_space<smem>>
    %62 = vector.broadcast %61 : f32 to vector<2x128xf32>
    %63 = arith.subf %25, %62 : vector<2x128xf32>
    %64 = arith.mulf %63, %63 : vector<2x128xf32>
    %c1_44 = arith.constant 1 : index
    %c1_45 = arith.constant 1 : index
    %65 = memref.load %arg5[%c1_44, %c1_45] : memref<3x2xf32, #tpu.memory_space<smem>>
    %66 = vector.broadcast %65 : f32 to vector<2x128xf32>
    %67 = arith.subf %43, %66 : vector<2x128xf32>
    %68 = arith.mulf %67, %67 : vector<2x128xf32>
    %69 = arith.addf %64, %68 : vector<2x128xf32>
    %70 = arith.cmpf olt, %69, %52 : vector<2x128xf32>
    %71 = arith.select %70, %69, %52 : vector<2x128xi1>, vector<2x128xf32>
    %c1_46 = arith.constant 1 : index
    %c0_47 = arith.constant 0 : index
    %72 = memref.load %arg6[%c1_46, %c0_47] : memref<3x4xf32, #tpu.memory_space<smem>>
    %73 = vector.broadcast %72 : f32 to vector<2x128xf32>
    %74 = arith.select %70, %73, %54 : vector<2x128xi1>, vector<2x128xf32>
    %c1_48 = arith.constant 1 : index
    %c1_49 = arith.constant 1 : index
    %75 = memref.load %arg6[%c1_48, %c1_49] : memref<3x4xf32, #tpu.memory_space<smem>>
    %76 = vector.broadcast %75 : f32 to vector<2x128xf32>
    %77 = arith.select %70, %76, %56 : vector<2x128xi1>, vector<2x128xf32>
    %c1_50 = arith.constant 1 : index
    %c2_51 = arith.constant 2 : index
    %78 = memref.load %arg6[%c1_50, %c2_51] : memref<3x4xf32, #tpu.memory_space<smem>>
    %79 = vector.broadcast %78 : f32 to vector<2x128xf32>
    %80 = arith.select %70, %79, %58 : vector<2x128xi1>, vector<2x128xf32>
    %c1_52 = arith.constant 1 : index
    %c3_53 = arith.constant 3 : index
    %81 = memref.load %arg6[%c1_52, %c3_53] : memref<3x4xf32, #tpu.memory_space<smem>>
    %82 = vector.broadcast %81 : f32 to vector<2x128xf32>
    %83 = arith.select %70, %82, %60 : vector<2x128xi1>, vector<2x128xf32>
    %c2_54 = arith.constant 2 : index
    %c0_55 = arith.constant 0 : index
    %84 = memref.load %arg5[%c2_54, %c0_55] : memref<3x2xf32, #tpu.memory_space<smem>>
    %85 = vector.broadcast %84 : f32 to vector<2x128xf32>
    %86 = arith.subf %25, %85 : vector<2x128xf32>
    %87 = arith.mulf %86, %86 : vector<2x128xf32>
    %c2_56 = arith.constant 2 : index
    %c1_57 = arith.constant 1 : index
    %88 = memref.load %arg5[%c2_56, %c1_57] : memref<3x2xf32, #tpu.memory_space<smem>>
    %89 = vector.broadcast %88 : f32 to vector<2x128xf32>
    %90 = arith.subf %43, %89 : vector<2x128xf32>
    %91 = arith.mulf %90, %90 : vector<2x128xf32>
    %92 = arith.addf %87, %91 : vector<2x128xf32>
    %93 = arith.cmpf olt, %92, %71 : vector<2x128xf32>
    %94 = arith.select %93, %92, %71 : vector<2x128xi1>, vector<2x128xf32>
    %c2_58 = arith.constant 2 : index
    %c0_59 = arith.constant 0 : index
    %95 = memref.load %arg6[%c2_58, %c0_59] : memref<3x4xf32, #tpu.memory_space<smem>>
    %96 = vector.broadcast %95 : f32 to vector<2x128xf32>
    %97 = arith.select %93, %96, %74 : vector<2x128xi1>, vector<2x128xf32>
    %c2_60 = arith.constant 2 : index
    %c1_61 = arith.constant 1 : index
    %98 = memref.load %arg6[%c2_60, %c1_61] : memref<3x4xf32, #tpu.memory_space<smem>>
    %99 = vector.broadcast %98 : f32 to vector<2x128xf32>
    %100 = arith.select %93, %99, %77 : vector<2x128xi1>, vector<2x128xf32>
    %c2_62 = arith.constant 2 : index
    %c2_63 = arith.constant 2 : index
    %101 = memref.load %arg6[%c2_62, %c2_63] : memref<3x4xf32, #tpu.memory_space<smem>>
    %102 = vector.broadcast %101 : f32 to vector<2x128xf32>
    %103 = arith.select %93, %102, %80 : vector<2x128xi1>, vector<2x128xf32>
    %c2_64 = arith.constant 2 : index
    %c3_65 = arith.constant 3 : index
    %104 = memref.load %arg6[%c2_64, %c3_65] : memref<3x4xf32, #tpu.memory_space<smem>>
    %105 = vector.broadcast %104 : f32 to vector<2x128xf32>
    %106 = arith.select %93, %105, %83 : vector<2x128xi1>, vector<2x128xf32>
    %c0_66 = arith.constant 0 : index
    %c0_67 = arith.constant 0 : index
    %c0_68 = arith.constant 0 : index
    %c0_69 = arith.constant 0 : index
    %107 = vector.load %arg7[%c0_66, %c0_67, %c0_68, %c0_69] : memref<1x4x2x128xf32, #tpu.memory_space<vmem>>, vector<1x1x2x128xf32>
    %108 = vector.shape_cast %107 : vector<1x1x2x128xf32> to vector<2x128xf32>
    %109 = vector.shape_cast %97 : vector<2x128xf32> to vector<1x1x2x128xf32>
    tpu.vector_store %arg7[%c0_66, %c0_67, %c0_68, %c0_69], %109 {strides = array<i32>} : memref<1x4x2x128xf32, #tpu.memory_space<vmem>>, vector<1x1x2x128xf32>,
    %c0_70 = arith.constant 0 : index
    %c1_71 = arith.constant 1 : index
    %c0_72 = arith.constant 0 : index
    %c0_73 = arith.constant 0 : index
    %110 = vector.load %arg7[%c0_70, %c1_71, %c0_72, %c0_73] : memref<1x4x2x128xf32, #tpu.memory_space<vmem>>, vector<1x1x2x128xf32>
    %111 = vector.shape_cast %110 : vector<1x1x2x128xf32> to vector<2x128xf32>
    %112 = vector.shape_cast %100 : vector<2x128xf32> to vector<1x1x2x128xf32>
    tpu.vector_store %arg7[%c0_70, %c1_71, %c0_72, %c0_73], %112 {strides = array<i32>} : memref<1x4x2x128xf32, #tpu.memory_space<vmem>>, vector<1x1x2x128xf32>,
    %c0_74 = arith.constant 0 : index
    %c2_75 = arith.constant 2 : index
    %c0_76 = arith.constant 0 : index
    %c0_77 = arith.constant 0 : index
    %113 = vector.load %arg7[%c0_74, %c2_75, %c0_76, %c0_77] : memref<1x4x2x128xf32, #tpu.memory_space<vmem>>, vector<1x1x2x128xf32>
    %114 = vector.shape_cast %113 : vector<1x1x2x128xf32> to vector<2x128xf32>
    %115 = vector.shape_cast %103 : vector<2x128xf32> to vector<1x1x2x128xf32>
    tpu.vector_store %arg7[%c0_74, %c2_75, %c0_76, %c0_77], %115 {strides = array<i32>} : memref<1x4x2x128xf32, #tpu.memory_space<vmem>>, vector<1x1x2x128xf32>,
    %c0_78 = arith.constant 0 : index
    %c3_79 = arith.constant 3 : index
    %c0_80 = arith.constant 0 : index
    %c0_81 = arith.constant 0 : index
    %116 = vector.load %arg7[%c0_78, %c3_79, %c0_80, %c0_81] : memref<1x4x2x128xf32, #tpu.memory_space<vmem>>, vector<1x1x2x128xf32>
    %117 = vector.shape_cast %116 : vector<1x1x2x128xf32> to vector<2x128xf32>
    %118 = vector.shape_cast %106 : vector<2x128xf32> to vector<1x1x2x128xf32>
    tpu.vector_store %arg7[%c0_78, %c3_79, %c0_80, %c0_81], %118 {strides = array<i32>} : memref<1x4x2x128xf32, #tpu.memory_space<vmem>>, vector<1x1x2x128xf32>,
    %119 = vector.shape_cast %94 : vector<2x128xf32> to vector<1x2x128xf32>
    %cst = arith.constant dense<0.000000e+00> : vector<1xf32>
    %120 = vector.multi_reduction <add>, %119, %cst [1, 2] : vector<1x2x128xf32> to vector<1xf32>
    %121 = vector.shape_cast %120 : vector<1xf32> to vector<1x1x1xf32>
    %122 = vector.extract %121[0, 0, 0] : f32 from vector<1x1x1xf32>
    %123 = vector.broadcast %122 : f32 to vector<1x1xf32>
    %c0_82 = arith.constant 0 : index
    %c0_83 = arith.constant 0 : index
    %c0_84 = arith.constant 0 : index
    %c0_85 = arith.constant 0 : index
    %124 = vector.load %arg8[%c0_82, %c0_83, %c0_84, %c0_85] : memref<1x1x1x1xf32, #tpu.memory_space<vmem>>, vector<1x1x1x1xf32>
    %125 = vector.shape_cast %124 : vector<1x1x1x1xf32> to vector<1x1xf32>
    %126 = vector.shape_cast %123 : vector<1x1xf32> to vector<1x1x1x1xf32>
    tpu.vector_store %arg8[%c0_82, %c0_83, %c0_84, %c0_85], %126 {strides = array<i32>} : memref<1x1x1x1xf32, #tpu.memory_space<vmem>>, vector<1x1x1x1xf32>,
    return
  }
  func.func @transform_0(%arg0: i32, %arg1: i32) -> (i32, i32, i32, i32) {
    %c0_i32 = arith.constant 0 : i32
    %c0_i32_0 = arith.constant 0 : i32
    %c0_i32_1 = arith.constant 0 : i32
    return %arg0, %c0_i32, %arg1, %c0_i32_0 : i32, i32, i32, i32
  }
  func.func @transform_1(%arg0: i32, %arg1: i32) -> (i32, i32) {
    %c0_i32 = arith.constant 0 : i32
    %c0_i32_0 = arith.constant 0 : i32
    %c0_i32_1 = arith.constant 0 : i32
    return %c0_i32, %c0_i32_0 : i32, i32
  }
  func.func @transform_2(%arg0: i32, %arg1: i32) -> i32 {
    %c0_i32 = arith.constant 0 : i32
    %c0_i32_0 = arith.constant 0 : i32
    return %c0_i32 : i32
  }
  func.func @transform_3(%arg0: i32, %arg1: i32) -> (i32, i32) {
    %c0_i32 = arith.constant 0 : i32
    %c0_i32_0 = arith.constant 0 : i32
    %c0_i32_1 = arith.constant 0 : i32
    return %c0_i32, %c0_i32_0 : i32, i32
  }
  func.func @transform_4(%arg0: i32, %arg1: i32) -> (i32, i32) {
    %c0_i32 = arith.constant 0 : i32
    %c0_i32_0 = arith.constant 0 : i32
    %c0_i32_1 = arith.constant 0 : i32
    return %c0_i32, %c0_i32_0 : i32, i32
  }
  func.func @transform_5(%arg0: i32, %arg1: i32) -> (i32, i32, i32, i32) {
    %c0_i32 = arith.constant 0 : i32
    %c0_i32_0 = arith.constant 0 : i32
    %c0_i32_1 = arith.constant 0 : i32
    return %arg0, %c0_i32, %arg1, %c0_i32_0 : i32, i32, i32, i32
  }
  func.func @transform_6(%arg0: i32, %arg1: i32) -> (i32, i32, i32, i32) {
    %c0_i32 = arith.constant 0 : i32
    %c0_i32_0 = arith.constant 0 : i32
    %c0_i32_1 = arith.constant 0 : i32
    return %arg0, %arg1, %c0_i32, %c0_i32_0 : i32, i32, i32, i32
  }
}

</mosaic_0001>

<llo_original>
// kernel: vq_latent_space.1
$region0: #{vq_latent_space.1}
  #allocation0 [shape = 'u32[]', space=smem, size = 0x4, offset = 0x4, fixed_abs, tag = 'smem constant byte address 0x4 - core index']
  #allocation1 [shape = 'u32[144,128]{1,0:T(1,128)}', space=vmem, size = 0x12000, scoped, tag = 'internal scratch']
  %s0 = inlined_call_operand.vmem [shape: f32[2,4,2,128], index: 0, kind: input, shape index: {}]
  %s1 = inlined_call_operand.vmem [shape: f32[2,4], index: 1, kind: input, shape index: {}]
  %s2 = inlined_call_operand.vmem [shape: f32[2], index: 2, kind: input, shape index: {}]
  %s3 = inlined_call_operand.vmem [shape: f32[3,2], index: 3, kind: input, shape index: {}]
  %s4 = inlined_call_operand.vmem [shape: f32[3,4], index: 4, kind: input, shape index: {}]
  %s5 = inlined_call_operand.vmem [shape: f32[2,4,2,128], index: 5, kind: output, shape index: {0}]
  %s6 = inlined_call_operand.vmem [shape: f32[2,1,1,1], index: 6, kind: output, shape index: {1}]
  %7 = xla_tuple %s5, %s6
  %s8 = sld [smem:[#allocation0]]
  $region77: #{vq_latent_space.1} parent=0
    _
  %s10 = ssub.s32 1, %s8
  %s11 = scalar_select 0, %s10, %s8
  $region1: #{vq_latent_space.1} parent=0
    #allocation2 [shape = 'u8[1024]{0}', space=smem, size = 0x400, scoped, tag = 'input window, operand 1, single buffered']
    #allocation3 [shape = 's32[2]{0}', space=sflag, size = 0x8, scoped, tag = 'scoped memory for vq_latent_space.1']
    #allocation4 [shape = 'u8[512]{0}', space=smem, size = 0x200, scoped, tag = 'input window, operand 2, single buffered']
    #allocation5 [shape = 's32[1]{0}', space=sflag, size = 0x4, scoped, tag = 'scoped memory for vq_latent_space.1']
    #allocation6 [shape = 'u8[2048]{0}', space=smem, size = 0x800, scoped, tag = 'input window, operand 3, single buffered']
    #allocation7 [shape = 'u8[2048]{0}', space=smem, size = 0x800, scoped, tag = 'input window, operand 4, single buffered']
    #allocation8 [shape = 's32[1]{0}', space=sflag, size = 0x4, scoped, tag = 'scoped memory for vq_latent_space.1']
    %12 = vsyncpa [#allocation3], 0
    %13 = vsyncpa [#allocation5], 0
    %14 = vsyncpa [#allocation8], 0
    loop: start=0, step=1, limit=4
    $region2: #{vq_latent_space.1} parent=1 // loop_pre_header
      _
    $region3: #{vq_latent_space.1} parent=1 // loop_header
      %s16 = sphi 0, %s20
      %p17 = scmp.ge.s32.totalorder %s16, 4
      %s23 = sphi 0, %s35
      %s24 = sphi 0, %s31
      %s25 = sphi 0, %s23
      %s26 = sphi 0, %s24
      %s27 = sphi 0, %s25
      %s28 = sphi 0, %s26
      %s40 = sphi 0, %s42
      %s43 = sphi 0, %s40
      %s44 = sphi 0, %s43
      %s60 = sphi 0, %s44
      %s64 = sphi 0, %s64
      %s66 = sphi 0, %s64
      %s67 = sphi 0, %s66
      %s81 = sphi 0, %s67
      %s85 = sphi 0, %s85
      %s87 = sphi 0, %s85
      %s88 = sphi 0, %s87
      %s102 = sphi 0, %s88
      %s106 = sphi 0, %s106
      %s108 = sphi 0, %s106
      %s109 = sphi 0, %s108
      %s123 = sphi 0, %s109
      %s127 = sphi 0, %s127
      %s129 = sphi 0, %s127
      %s130 = sphi 0, %s129
      %s144 = sphi 0, %s130
      %s152 = sphi 0, %s154
      %s155 = sphi 0, %s152
      %s156 = sphi 0, %s155
      %s172 = sphi 0, %s156
      %s180 = sphi 0, %s182
      %s183 = sphi 0, %s180
      %s184 = sphi 0, %s183
      %s200 = sphi 0, %s184
    $region4: #{vq_latent_space.1} parent=1 // loop_header_branch
      %19 = sbr.rel (%p17) target = $region8
    $region5: #{vq_latent_space.1} parent=1 // loop_body
      %s21 = ssub.s32 %s16, 1
      %s22 = ssub.s32 %s16, 2
      %s29 = sadd.s32 1, %s24
      %p30 = scmp.ge.s32.totalorder %s29, 1
      %s31 = scalar_select %p30, 0, %s29
      %s32 = sadd.s32 1, %s23
      %s33 = scalar_select %p30, %s32, %s23
      %p34 = scmp.ge.s32.totalorder %s33, 2
      %s35 = scalar_select %p34, 0, %s33
      %s36 = ssub.s32 %s23, %s35
      %s37 = ssub.s32 %s24, %s31
      %s38 = sor.u32 %s36, %s37
      %p39 = scmp.eq.s32.totalorder %s38, 0
      %s41 = sadd.s32 %s40, 1
      %s42 = scalar_select %p39, %s40, %s41
      %p45 = pneg %p39
      %p46 = scmp.eq.s32.totalorder %s16, 1
      %p47 = por %p45, %p46
      %p48 = scmp.ne.s32.totalorder %s40, %s43
      %p49 = scmp.eq.s32.totalorder %s16, 0
      %p50 = por %p48, %p49
      %p51 = scmp.ne.s32.totalorder %s40, %s43
      %p52 = scmp.eq.s32.totalorder %s21, 1
      %p53 = por %p51, %p52
      %p54 = scmp.ne.s32.totalorder %s43, %s44
      %p55 = scmp.eq.s32.totalorder %s21, 0
      %p56 = por %p54, %p55
      %p57 = scmp.ne.s32.totalorder %s43, %s44
      %p58 = scmp.eq.s32.totalorder %s22, 1
      %p59 = por %p57, %p58
      %p61 = scmp.ne.s32.totalorder %s44, %s60
      %p62 = scmp.eq.s32.totalorder %s22, 0
      %p63 = por %p61, %p62
      %s65 = sadd.s32 %s64, 1
      %p68 = scmp.eq.s32.totalorder %s16, 1
      %p69 = scmp.ne.s32.totalorder %s64, %s66
      %p70 = scmp.eq.s32.totalorder %s16, 0
      %p71 = por %p69, %p70
      %p72 = scmp.ne.s32.totalorder %s64, %s66
      %p73 = scmp.eq.s32.totalorder %s21, 1
      %p74 = por %p72, %p73
      %p75 = scmp.ne.s32.totalorder %s66, %s67
      %p76 = scmp.eq.s32.totalorder %s21, 0
      %p77 = por %p75, %p76
      %p78 = scmp.ne.s32.totalorder %s66, %s67
      %p79 = scmp.eq.s32.totalorder %s22, 1
      %p80 = por %p78, %p79
      %p82 = scmp.ne.s32.totalorder %s67, %s81
      %p83 = scmp.eq.s32.totalorder %s22, 0
      %p84 = por %p82, %p83
      %s86 = sadd.s32 %s85, 1
      %p89 = scmp.eq.s32.totalorder %s16, 1
      %p90 = scmp.ne.s32.totalorder %s85, %s87
      %p91 = scmp.eq.s32.totalorder %s16, 0
      %p92 = por %p90, %p91
      %p93 = scmp.ne.s32.totalorder %s85, %s87
      %p94 = scmp.eq.s32.totalorder %s21, 1
      %p95 = por %p93, %p94
      %p96 = scmp.ne.s32.totalorder %s87, %s88
      %p97 = scmp.eq.s32.totalorder %s21, 0
      %p98 = por %p96, %p97
      %p99 = scmp.ne.s32.totalorder %s87, %s88
      %p100 = scmp.eq.s32.totalorder %s22, 1
      %p101 = por %p99, %p100
      %p103 = scmp.ne.s32.totalorder %s88, %s102
      %p104 = scmp.eq.s32.totalorder %s22, 0
      %p105 = por %p103, %p104
      %s107 = sadd.s32 %s106, 1
      %p110 = scmp.eq.s32.totalorder %s16, 1
      %p111 = scmp.ne.s32.totalorder %s106, %s108
      %p112 = scmp.eq.s32.totalorder %s16, 0
      %p113 = por %p111, %p112
      %p114 = scmp.ne.s32.totalorder %s106, %s108
      %p115 = scmp.eq.s32.totalorder %s21, 1
      %p116 = por %p114, %p115
      %p117 = scmp.ne.s32.totalorder %s108, %s109
      %p118 = scmp.eq.s32.totalorder %s21, 0
      %p119 = por %p117, %p118
      %p120 = scmp.ne.s32.totalorder %s108, %s109
      %p121 = scmp.eq.s32.totalorder %s22, 1
      %p122 = por %p120, %p121
      %p124 = scmp.ne.s32.totalorder %s109, %s123
      %p125 = scmp.eq.s32.totalorder %s22, 0
      %p126 = por %p124, %p125
      %s128 = sadd.s32 %s127, 1
      %p131 = scmp.eq.s32.totalorder %s16, 1
      %p132 = scmp.ne.s32.totalorder %s127, %s129
      %p133 = scmp.eq.s32.totalorder %s16, 0
      %p134 = por %p132, %p133
      %p135 = scmp.ne.s32.totalorder %s127, %s129
      %p136 = scmp.eq.s32.totalorder %s21, 1
      %p137 = por %p135, %p136
      %p138 = scmp.ne.s32.totalorder %s129, %s130
      %p139 = scmp.eq.s32.totalorder %s21, 0
      %p140 = por %p138, %p139
      %p141 = scmp.ne.s32.totalorder %s129, %s130
      %p142 = scmp.eq.s32.totalorder %s22, 1
      %p143 = por %p141, %p142
      %p145 = scmp.ne.s32.totalorder %s130, %s144
      %p146 = scmp.eq.s32.totalorder %s22, 0
      %p147 = por %p145, %p146
      %s148 = ssub.s32 %s23, %s35
      %s149 = ssub.s32 %s24, %s31
      %s150 = sor.u32 %s148, %s149
      %p151 = scmp.eq.s32.totalorder %s150, 0
      %s153 = sadd.s32 %s152, 1
      %s154 = scalar_select %p151, %s152, %s153
      %p157 = pneg %p151
      %p158 = scmp.eq.s32.totalorder %s16, 1
      %p159 = por %p157, %p158
      %p160 = scmp.ne.s32.totalorder %s152, %s155
      %p161 = scmp.eq.s32.totalorder %s16, 0
      %p162 = por %p160, %p161
      %p163 = scmp.ne.s32.totalorder %s152, %s155
      %p164 = scmp.eq.s32.totalorder %s21, 1
      %p165 = por %p163, %p164
      %p166 = scmp.ne.s32.totalorder %s155, %s156
      %p167 = scmp.eq.s32.totalorder %s21, 0
      %p168 = por %p166, %p167
      %p169 = scmp.ne.s32.totalorder %s155, %s156
      %p170 = scmp.eq.s32.totalorder %s22, 1
      %p171 = por %p169, %p170
      %p173 = scmp.ne.s32.totalorder %s156, %s172
      %p174 = scmp.eq.s32.totalorder %s22, 0
      %p175 = por %p173, %p174
      %s176 = ssub.s32 %s23, %s35
      %s177 = ssub.s32 %s24, %s31
      %s178 = sor.u32 %s176, %s177
      %p179 = scmp.eq.s32.totalorder %s178, 0
      %s181 = sadd.s32 %s180, 1
      %s182 = scalar_select %p179, %s180, %s181
      %p185 = pneg %p179
      %p186 = scmp.eq.s32.totalorder %s16, 1
      %p187 = por %p185, %p186
      %p188 = scmp.ne.s32.totalorder %s180, %s183
      %p189 = scmp.eq.s32.totalorder %s16, 0
      %p190 = por %p188, %p189
      %p191 = scmp.ne.s32.totalorder %s180, %s183
      %p192 = scmp.eq.s32.totalorder %s21, 1
      %p193 = por %p191, %p192
      %p194 = scmp.ne.s32.totalorder %s183, %s184
      %p195 = scmp.eq.s32.totalorder %s21, 0
      %p196 = por %p194, %p195
      %p197 = scmp.ne.s32.totalorder %s183, %s184
      %p198 = scmp.eq.s32.totalorder %s22, 1
      %p199 = por %p197, %p198
      %p201 = scmp.ne.s32.totalorder %s184, %s200
      %p202 = scmp.eq.s32.totalorder %s22, 0
      %p203 = por %p201, %p202
      %p204 = scmp.le.s32.totalorder 1, %s16
      %p205 = scmp.lt.s32.totalorder %s16, 3
      %p206 = pnand %p204, %p205
      %p207 = pneg %p206
      // Predicated region
      $region9: #{vq_latent_space.1} parent=5 // pred_check
        _
      $region10: #{vq_latent_space.1} parent=5 // pred_check_branch
        %209 = sbr.rel (%p206) target = $region12
      $region11: #{vq_latent_space.1} parent=5 // pred_region
        %s210 = ssub.s32 %s16, 1
        // Predicated region
        $region13: #{vq_latent_space.1} parent=11 // pred_check
          %p211 = pneg %p77
        $region14: #{vq_latent_space.1} parent=11 // pred_check_branch
          %213 = sbr.rel (%p211) target = $region16
        $region15: #{vq_latent_space.1} parent=11 // pred_region
          %s215 = ssub.s32 32, 32
          %216 = vsyncadd [#allocation3], %s215
          %s218 = sshll.u32 %s1, 4
          %s219 = int_to_ptr.vmem [resolvable:$true] %s218
          %221 = dma.vmem_to_smem %s219, 32, [#allocation2], [#allocation3]
        $region16: #{vq_latent_space.1} parent=11 // pred_fallthru
          _
        // Predicated region
        $region17: #{vq_latent_space.1} parent=11 // pred_check
          %p222 = pneg %p98
        $region18: #{vq_latent_space.1} parent=11 // pred_check_branch
          %224 = sbr.rel (%p222) target = $region20
        $region19: #{vq_latent_space.1} parent=11 // pred_region
          %s226 = ssub.s32 16, 16
          %227 = vsyncadd [#allocation5], %s226
          %s229 = sshll.u32 %s2, 4
          %s230 = int_to_ptr.vmem [resolvable:$true] %s229
          %232 = dma.vmem_to_smem %s230, 16, [#allocation4], [#allocation5]
        $region20: #{vq_latent_space.1} parent=11 // pred_fallthru
          _
        // Predicated region
        $region21: #{vq_latent_space.1} parent=11 // pred_check
          %p233 = pneg %p119
        $region22: #{vq_latent_space.1} parent=11 // pred_check_branch
          %235 = sbr.rel (%p233) target = $region24
        $region23: #{vq_latent_space.1} parent=11 // pred_region
          %s237 = ssub.s32 64, 64
          %238 = vsyncadd [#allocation5], %s237
          %s240 = sshll.u32 %s3, 4
          %s241 = int_to_ptr.vmem [resolvable:$true] %s240
          %243 = dma.vmem_to_smem %s241, 64, [#allocation6], [#allocation5]
        $region24: #{vq_latent_space.1} parent=11 // pred_fallthru
          _
        // Predicated region
        $region25: #{vq_latent_space.1} parent=11 // pred_check
          %p244 = pneg %p140
        $region26: #{vq_latent_space.1} parent=11 // pred_check_branch
          %246 = sbr.rel (%p244) target = $region28
        $region27: #{vq_latent_space.1} parent=11 // pred_region
          %s248 = ssub.s32 64, 64
          %249 = vsyncadd [#allocation8], %s248
          %s251 = sshll.u32 %s4, 4
          %s252 = int_to_ptr.vmem [resolvable:$true] %s251
          %254 = dma.vmem_to_smem %s252, 64, [#allocation7], [#allocation8]
        $region28: #{vq_latent_space.1} parent=11 // pred_fallthru
          _
      $region12: #{vq_latent_space.1} parent=5 // pred_fallthru
        _
      %p255 = scmp.lt.s32.totalorder %s16, 2
      // Predicated region
      $region29: #{vq_latent_space.1} parent=5 // pred_check
        %p256 = pneg %p255
      $region30: #{vq_latent_space.1} parent=5 // pred_check_branch
        %258 = sbr.rel (%p256) target = $region32
      $region31: #{vq_latent_space.1} parent=5 // pred_region
        // Predicated region
        $region33: #{vq_latent_space.1} parent=31 // pred_check
          %p259 = pneg %p50
        $region34: #{vq_latent_space.1} parent=31 // pred_check_branch
          %261 = sbr.rel (%p259) target = $region36
        $region35: #{vq_latent_space.1} parent=31 // pred_region
          %p262 = scmp.lt.s32.totalorder %s23, 1
          %s263 = scalar_select %p262, %s23, 1
          %p264 = scmp.lt.s32.totalorder %s24, 0
          %s265 = scalar_select %p264, %s24, 0
          %s266 = smul.addr %s263, 4
          %s267 = sadd.s32 %s265, %s266
          %s268 = smul.addr %s267, 2
          %s269 = scalar_lea.vmem %s0, %s268
        $region36: #{vq_latent_space.1} parent=31 // pred_fallthru
          _
      $region32: #{vq_latent_space.1} parent=5 // pred_fallthru
        _
      %p270 = scmp.le.s32.totalorder 1, %s16
      %p271 = scmp.lt.s32.totalorder %s16, 3
      %p272 = pnand %p270, %p271
      %p273 = pneg %p272
      // Predicated region
      $region37: #{vq_latent_space.1} parent=5 // pred_check
        _
      $region38: #{vq_latent_space.1} parent=5 // pred_check_branch
        %275 = sbr.rel (%p272) target = $region40
      $region39: #{vq_latent_space.1} parent=5 // pred_region
        %s276 = ssub.s32 %s16, 1
        // Predicated region
        $region41: #{vq_latent_space.1} parent=39 // pred_check
          %p277 = pneg %p77
        $region42: #{vq_latent_space.1} parent=39 // pred_check_branch
          %279 = sbr.rel (%p277) target = $region44
        $region43: #{vq_latent_space.1} parent=39 // pred_region
          %280 = dma.done [#allocation3], 32
        $region44: #{vq_latent_space.1} parent=39 // pred_fallthru
          _
        // Predicated region
        $region45: #{vq_latent_space.1} parent=39 // pred_check
          %p281 = pneg %p98
        $region46: #{vq_latent_space.1} parent=39 // pred_check_branch
          %283 = sbr.rel (%p281) target = $region48
        $region47: #{vq_latent_space.1} parent=39 // pred_region
          %284 = dma.done [#allocation5], 16
        $region48: #{vq_latent_space.1} parent=39 // pred_fallthru
          _
        // Predicated region
        $region49: #{vq_latent_space.1} parent=39 // pred_check
          %p285 = pneg %p119
        $region50: #{vq_latent_space.1} parent=39 // pred_check_branch
          %287 = sbr.rel (%p285) target = $region52
        $region51: #{vq_latent_space.1} parent=39 // pred_region
          %288 = dma.done [#allocation5], 64
        $region52: #{vq_latent_space.1} parent=39 // pred_fallthru
          _
        // Predicated region
        $region53: #{vq_latent_space.1} parent=39 // pred_check
          %p289 = pneg %p140
        $region54: #{vq_latent_space.1} parent=39 // pred_check_branch
          %291 = sbr.rel (%p289) target = $region56
        $region55: #{vq_latent_space.1} parent=39 // pred_region
          %292 = dma.done [#allocation8], 64
        $region56: #{vq_latent_space.1} parent=39 // pred_fallthru
          _
        %293 = sfence
        %p294 = scmp.lt.s32.totalorder %s25, 1
        %s295 = scalar_select %p294, %s25, 1
        %p296 = scmp.lt.s32.totalorder %s26, 0
        %s297 = scalar_select %p296, %s26, 0
        %s298 = smul.addr %s295, 4
        %s299 = sadd.s32 %s297, %s298
        %s300 = smul.addr %s299, 2
        %s301 = scalar_lea.vmem %s0, %s300
        %p302 = pneg %p56
        %p303 = pneg %p53
        %p304 = pneg %p77
        %p305 = pneg %p74
        %p306 = pneg %p98
        %p307 = pneg %p95
        %p308 = pneg %p119
        %p309 = pneg %p116
        %p310 = pneg %p140
        %p311 = pneg %p137
        %p312 = pneg %p168
        %p313 = pneg %p165
        %p314 = scmp.lt.s32.totalorder %s25, 1
        %s315 = scalar_select %p314, %s25, 1
        %p316 = scmp.lt.s32.totalorder %s26, 0
        %s317 = scalar_select %p316, %s26, 0
        %s318 = smul.addr %s315, 4
        %s319 = sadd.s32 %s317, %s318
        %s320 = smul.addr %s319, 2
        %s321 = scalar_lea.vmem %s5, %s320
        %p322 = pneg %p196
        %p323 = pneg %p193
        %p324 = scmp.lt.s32.totalorder %s25, 1
        %s325 = scalar_select %p324, %s25, 1
        %p326 = scmp.lt.s32.totalorder %s26, 0
        %s327 = scalar_select %p326, %s26, 0
        %s328 = sadd.s32 %s327, %s325
        %s329 = scalar_lea.vmem %s6, %s328
        %p330 = scmp.lt.s32.totalorder %s25, 1
        %s331 = scalar_select %p330, %s25, 1
        %p332 = scmp.lt.s32.totalorder %s26, 0
        %s333 = scalar_select %p332, %s26, 0
        %s334 = smul.addr %s331, 4
        %s335 = sadd.s32 %s333, %s334
        %s336 = smul.addr %s335, 2
        %s337 = scalar_lea.vmem %s0, %s336
        %p338 = scmp.lt.s32.totalorder %s25, 1
        %s339 = scalar_select %p338, %s25, 1
        %p340 = scmp.lt.s32.totalorder %s26, 0
        %s341 = scalar_select %p340, %s26, 0
        %s342 = smul.addr %s339, 4
        %s343 = sadd.s32 %s341, %s342
        %s344 = smul.addr %s343, 2
        %s345 = scalar_lea.vmem %s5, %s344
        %p346 = scmp.lt.s32.totalorder %s25, 1
        %s347 = scalar_select %p346, %s25, 1
        %p348 = scmp.lt.s32.totalorder %s26, 0
        %s349 = scalar_select %p348, %s26, 0
        %s350 = sadd.s32 %s349, %s347
        %s351 = scalar_lea.vmem %s6, %s350
        %v352 = vld [vmem:[%s337] sm:$0x3]
        %s353 = scalar_lea.vmem %s337, 2
        %v354 = vld [vmem:[%s353] sm:$0x3]
        %s355 = scalar_lea.vmem %s337, 4
        %v356 = vld [vmem:[%s355] sm:$0x3]
        %s357 = scalar_lea.vmem %s337, 6
        %v358 = vld [vmem:[%s357] sm:$0x3]
        %s359 = sld [smem:[#allocation2]]
        %v360 = vstv %s359
        %v361 = vmul.f32 %v360, %v352
        %s362 = sld [smem:[#allocation2 + $0x1]]
        %v363 = vstv %s362
        %v364 = vmul.f32 %v363, %v354
        %v365 = vadd.f32 %v361, %v364
        %s366 = sld [smem:[#allocation2 + $0x2]]
        %v367 = vstv %s366
        %v368 = vmul.f32 %v367, %v356
        %v369 = vadd.f32 %v365, %v368
        %s370 = sld [smem:[#allocation2 + $0x3]]
        %v371 = vstv %s370
        %v372 = vmul.f32 %v371, %v358
        %v373 = vadd.f32 %v369, %v372
        %s374 = sld [smem:[#allocation4]]
        %v375 = vstv %s374
        %v376 = vadd.f32 %v373, %v375
        %s377 = sld [smem:[#allocation2 + $0x80]]
        %v378 = vstv %s377
        %v379 = vmul.f32 %v378, %v352
        %s380 = sld [smem:[#allocation2 + $0x81]]
        %v381 = vstv %s380
        %v382 = vmul.f32 %v381, %v354
        %v383 = vadd.f32 %v379, %v382
        %s384 = sld [smem:[#allocation2 + $0x82]]
        %v385 = vstv %s384
        %v386 = vmul.f32 %v385, %v356
        %v387 = vadd.f32 %v383, %v386
        %s388 = sld [smem:[#allocation2 + $0x83]]
        %v389 = vstv %s388
        %v390 = vmul.f32 %v389, %v358
        %v391 = vadd.f32 %v387, %v390
        %s392 = sld [smem:[#allocation4 + $0x1]]
        %v393 = vstv %s392
        %v394 = vadd.f32 %v391, %v393
        %s395 = sld [smem:[#allocation6]]
        %v396 = vstv %s395
        %v397 = vsub.f32 %v376, %v396
        %v398 = vmul.f32 %v397, %v397
        %s399 = sld [smem:[#allocation6 + $0x1]]
        %v400 = vstv %s399
        %v401 = vsub.f32 %v394, %v400
        %v402 = vmul.f32 %v401, %v401
        %v403 = vadd.f32 %v398, %v402
        %s404 = sld [smem:[#allocation7]]
        %v405 = vstv %s404
        %s406 = sld [smem:[#allocation7 + $0x1]]
        %v407 = vstv %s406
        %s408 = sld [smem:[#allocation7 + $0x2]]
        %v409 = vstv %s408
        %s410 = sld [smem:[#allocation7 + $0x3]]
        %v411 = vstv %s410
        %s412 = sld [smem:[#allocation6 + $0x80]]
        %v413 = vstv %s412
        %v414 = vsub.f32 %v376, %v413
        %v415 = vmul.f32 %v414, %v414
        %s416 = sld [smem:[#allocation6 + $0x81]]
        %v417 = vstv %s416
        %v418 = vsub.f32 %v394, %v417
        %v419 = vmul.f32 %v418, %v418
        %v420 = vadd.f32 %v415, %v419
        %vm421 = vcmp.lt.f32.partialorder %v420, %v403
        %v422 = vsel %vm421, %v420, %v403
        %s423 = sld [smem:[#allocation7 + $0x80]]
        %v424 = vstv %s423
        %v425 = vsel %vm421, %v424, %v405
        %s426 = sld [smem:[#allocation7 + $0x81]]
        %v427 = vstv %s426
        %v428 = vsel %vm421, %v427, %v407
        %s429 = sld [smem:[#allocation7 + $0x82]]
        %v430 = vstv %s429
        %v431 = vsel %vm421, %v430, %v409
        %s432 = sld [smem:[#allocation7 + $0x83]]
        %v433 = vstv %s432
        %v434 = vsel %vm421, %v433, %v411
        %s435 = sld [smem:[#allocation6 + $0x100]]
        %v436 = vstv %s435
        %v437 = vsub.f32 %v376, %v436
        %v438 = vmul.f32 %v437, %v437
        %s439 = sld [smem:[#allocation6 + $0x101]]
        %v440 = vstv %s439
        %v441 = vsub.f32 %v394, %v440
        %v442 = vmul.f32 %v441, %v441
        %v443 = vadd.f32 %v438, %v442
        %vm444 = vcmp.lt.f32.partialorder %v443, %v422
        %v445 = vsel %vm444, %v443, %v422
        %s446 = sld [smem:[#allocation7 + $0x100]]
        %v447 = vstv %s446
        %v448 = vsel %vm444, %v447, %v425
        %s449 = sld [smem:[#allocation7 + $0x101]]
        %v450 = vstv %s449
        %v451 = vsel %vm444, %v450, %v428
        %s452 = sld [smem:[#allocation7 + $0x102]]
        %v453 = vstv %s452
        %v454 = vsel %vm444, %v453, %v431
        %s455 = sld [smem:[#allocation7 + $0x103]]
        %v456 = vstv %s455
        %v457 = vsel %vm444, %v456, %v434
        %458 = vst [vmem:[%s345] sm:$0x3] %v448
        %s459 = scalar_lea.vmem %s345, 2
        %460 = vst [vmem:[%s459] sm:$0x3] %v451
        %s461 = scalar_lea.vmem %s345, 4
        %462 = vst [vmem:[%s461] sm:$0x3] %v454
        %s463 = scalar_lea.vmem %s345, 6
        %464 = vst [vmem:[%s463] sm:$0x3] %v457
        %vm465 = vcmask 1041408
        %v466 = vsel %vm465, %v445, 0.0
        %467 = vadd.xlane.f32.xlu0 %v466
        %v468 = vpop.xlane.xlu0 %467
        %v469 = vrot.slane %v468, 4
        %v470 = vadd.f32 %v468, %v469
        %v471 = vrot.slane %v470, 2
        %v472 = vadd.f32 %v470, %v471
        %v473 = vrot.slane %v472, 1
        %v474 = vadd.f32 %v472, %v473
        %s475 = vtos %v474
        %v476 = vstv %s475
        %vm477 = vcmask 0
        %478 = vst.msk [vmem:[%s351] sm:$0x1] %vm477, %v476
        %p479 = scmp.lt.s32.totalorder %s25, 1
        %s480 = scalar_select %p479, %s25, 1
        %p481 = scmp.lt.s32.totalorder %s26, 0
        %s482 = scalar_select %p481, %s26, 0
        %s483 = smul.addr %s480, 4
        %s484 = sadd.s32 %s482, %s483
        %s485 = smul.addr %s484, 2
        %s486 = scalar_lea.vmem %s5, %s485
        %p487 = scmp.lt.s32.totalorder %s25, 1
        %s488 = scalar_select %p487, %s25, 1
        %p489 = scmp.lt.s32.totalorder %s26, 0
        %s490 = scalar_select %p489, %s26, 0
        %s491 = sadd.s32 %s490, %s488
        %s492 = scalar_lea.vmem %s6, %s491
        // Predicated region
        $region57: #{vq_latent_space.1} parent=39 // pred_check
          %p493 = pneg %p165
        $region58: #{vq_latent_space.1} parent=39 // pred_check_branch
          %495 = sbr.rel (%p493) target = $region60
        $region59: #{vq_latent_space.1} parent=39 // pred_region
          _
        $region60: #{vq_latent_space.1} parent=39 // pred_fallthru
          _
        // Predicated region
        $region61: #{vq_latent_space.1} parent=39 // pred_check
          %p496 = pneg %p193
        $region62: #{vq_latent_space.1} parent=39 // pred_check_branch
          %498 = sbr.rel (%p496) target = $region64
        $region63: #{vq_latent_space.1} parent=39 // pred_region
          _
        $region64: #{vq_latent_space.1} parent=39 // pred_fallthru
          _
      $region40: #{vq_latent_space.1} parent=5 // pred_fallthru
        _
      %p499 = scmp.le.s32.totalorder 2, %s16
      // Predicated region
      $region65: #{vq_latent_space.1} parent=5 // pred_check
        %p500 = pneg %p499
      $region66: #{vq_latent_space.1} parent=5 // pred_check_branch
        %502 = sbr.rel (%p500) target = $region68
      $region67: #{vq_latent_space.1} parent=5 // pred_region
        %s503 = ssub.s32 %s16, 2
        // Predicated region
        $region69: #{vq_latent_space.1} parent=67 // pred_check
          %p504 = pneg %p171
        $region70: #{vq_latent_space.1} parent=67 // pred_check_branch
          %506 = sbr.rel (%p504) target = $region72
        $region71: #{vq_latent_space.1} parent=67 // pred_region
          %p507 = scmp.lt.s32.totalorder %s27, 1
          %s508 = scalar_select %p507, %s27, 1
          %p509 = scmp.lt.s32.totalorder %s28, 0
          %s510 = scalar_select %p509, %s28, 0
          %s511 = smul.addr %s508, 4
          %s512 = sadd.s32 %s510, %s511
          %s513 = smul.addr %s512, 2
          %s514 = scalar_lea.vmem %s5, %s513
        $region72: #{vq_latent_space.1} parent=67 // pred_fallthru
          _
        // Predicated region
        $region73: #{vq_latent_space.1} parent=67 // pred_check
          %p515 = pneg %p199
        $region74: #{vq_latent_space.1} parent=67 // pred_check_branch
          %517 = sbr.rel (%p515) target = $region76
        $region75: #{vq_latent_space.1} parent=67 // pred_region
          %p518 = scmp.lt.s32.totalorder %s27, 1
          %s519 = scalar_select %p518, %s27, 1
          %p520 = scmp.lt.s32.totalorder %s28, 0
          %s521 = scalar_select %p520, %s28, 0
          %s522 = sadd.s32 %s521, %s519
          %s523 = scalar_lea.vmem %s6, %s522
        $region76: #{vq_latent_space.1} parent=67 // pred_fallthru
          _
      $region68: #{vq_latent_space.1} parent=5 // pred_fallthru
        _
    $region6: #{vq_latent_space.1} parent=1 // loop_footer
      %s20 = sadd.s32 1, %s16
    $region7: #{vq_latent_space.1} parent=1 // loop_footer_branch
      %15 = sbr.rel target = $region3
    $region8: #{vq_latent_space.1} parent=1 // loop_exit
      _
    %524 = vsyncpa [#allocation3], 1
    %s525 = scalar_lea.sflag [#allocation3], 1
    %526 = vsyncpa %s525, 1
    %527 = vsyncpa [#allocation5], 1
    %528 = vsyncpa [#allocation8], 1

</llo_original>
